<compile_context>
chip_gen: v7x
topology: tpu7x:2x2x1
jax: 0.10.0
libtpu: 0.0.40
codegen_flags: <defaults>
</compile_context>

<pallas_src>
import functools

import jax
import jax.numpy as jnp
from jax.experimental import pallas as pl
from jax.experimental.pallas import tpu as pltpu

N_BINS = 15


def _ece_partial_kernel(logits_ref, labels_ref,
                        count_ref, sumacc_ref, sumconf_ref,
                        *, total_n, n_bins):
    """Per-tile bin statistics.

    logits_ref : [C, TN]  (classes on sublanes, samples on lanes)
    labels_ref : [1, TN]  int32
    outputs    : [1, n_bins, 1] f32 each -- per-tile partial sums.
    """
    c, tn = logits_ref.shape
    x = logits_ref[...].astype(jnp.float32)  # upcast after DMA (native-dtype load)

    # conf = max softmax prob = exp(0) / sum(exp(x - rowmax)); no probs tensor.
    row_max = jnp.max(x, axis=0, keepdims=True)                        # [1, TN]
    denom = jnp.sum(jnp.exp(x - row_max), axis=0, keepdims=True)       # [1, TN]
    # Exact reciprocal: approx=True (~1e-4 rel err) could flip samples that sit
    # exactly on a bin boundary; it is only TN values per tile so it is cheap.
    conf_raw = pl.reciprocal(denom, approx=False)                      # [1, TN]

    # pred = argmax over classes, first occurrence (== torch.max tie-break).
    cls = jax.lax.broadcasted_iota(jnp.int32, (c, tn), 0)
    is_max = x >= row_max
    pred = jnp.min(jnp.where(is_max, cls, c), axis=0, keepdims=True)   # [1, TN]
    acc = (pred == labels_ref[...]).astype(jnp.float32)                # [1, TN]

    # Mask samples beyond N in the (possibly ragged) last tile: conf = 0 falls
    # outside every (lower, upper] bin, so masked lanes contribute nothing.
    col = jax.lax.broadcasted_iota(jnp.int32, (1, tn), 1) + pl.program_id(0) * tn
    conf = jnp.where(col < total_n, conf_raw, 0.0)                     # [1, TN]

    # Bin boundaries generated in-kernel: bin b = (b/n_bins, (b+1)/n_bins].
    b = jax.lax.broadcasted_iota(jnp.int32, (n_bins, 1), 0).astype(jnp.float32)
    inv = jnp.float32(1.0 / n_bins)
    lowers = b * inv                                                   # [nb, 1]
    uppers = (b + 1.0) * inv                                           # [nb, 1]
    in_bin = jnp.logical_and(conf > lowers, conf <= uppers).astype(jnp.float32)  # [nb, TN]

    count_ref[...] = jnp.sum(in_bin, axis=1, keepdims=True).reshape(1, n_bins, 1)
    sumacc_ref[...] = jnp.sum(in_bin * acc, axis=1, keepdims=True).reshape(1, n_bins, 1)
    sumconf_ref[...] = jnp.sum(in_bin * conf, axis=1, keepdims=True).reshape(1, n_bins, 1)


@functools.partial(jax.jit, static_argnames=("n_bins", "block_n"))
def ece_loss(logits, labels, n_bins: int = N_BINS, block_n: int = 1024):
    """Pallas equivalent of _ECELoss()(logits, labels). Returns shape (1,) f32."""
    n, c = logits.shape

    # Lane-dense layout: samples along the 128-lane axis (layout plumbing).
    logits_t = jnp.transpose(logits)                    # [C, N]
    labels_2d = labels.reshape(1, n).astype(jnp.int32)  # [1, N]

    # Tile size: multiple of 128 lanes, no larger than N rounded up to 128.
    block_n = max(128, -(-block_n // 128) * 128)
    block_n = min(block_n, -(-n // 128) * 128)
    num_tiles = pl.cdiv(n, block_n)

    kernel = functools.partial(_ece_partial_kernel, total_n=n, n_bins=n_bins)
    part_shape = jax.ShapeDtypeStruct((num_tiles, n_bins, 1), jnp.float32)

    counts, sum_acc, sum_conf = pl.pallas_call(
        kernel,
        grid=(num_tiles,),
        in_specs=[
            pl.BlockSpec((c, block_n), lambda i: (0, i)),
            pl.BlockSpec((1, block_n), lambda i: (0, i)),
        ],
        out_specs=[
            pl.BlockSpec((1, n_bins, 1), lambda i: (i, 0, 0)),
            pl.BlockSpec((1, n_bins, 1), lambda i: (i, 0, 0)),
            pl.BlockSpec((1, n_bins, 1), lambda i: (i, 0, 0)),
        ],
        out_shape=[part_shape, part_shape, part_shape],
        compiler_params=pltpu.CompilerParams(
            dimension_semantics=("parallel",),
        ),
    )(logits_t, labels_2d)

    # Trivial 15-wide finalize in the wrapper (keeps the grid axis fully
    # parallel across TensorCores, per the review).
    count = jnp.sum(counts, axis=(0, 2))      # [n_bins]
    s_acc = jnp.sum(sum_acc, axis=(0, 2))     # [n_bins]
    s_conf = jnp.sum(sum_conf, axis=(0, 2))   # [n_bins]

    prop_in_bin = count / jnp.float32(n)
    nonempty = count > 0
    safe = jnp.where(nonempty, count, 1.0)
    gap = jnp.abs(s_conf / safe - s_acc / safe)
    ece = jnp.sum(jnp.where(nonempty, gap * prop_in_bin, 0.0))
    return ece.reshape(1)


def _ece_reference(logits, labels, n_bins: int = N_BINS):
    """Pure-JAX reference mirroring the PyTorch _ECELoss.forward."""
    probs = jax.nn.softmax(logits.astype(jnp.float32), axis=1)
    conf = jnp.max(probs, axis=1)
    pred = jnp.argmax(probs, axis=1)
    acc = (pred == labels).astype(jnp.float32)
    bounds = jnp.linspace(0.0, 1.0, n_bins + 1)
    ece = jnp.zeros((), jnp.float32)
    for i in range(n_bins):
        in_bin = (conf > bounds[i]) & (conf <= bounds[i + 1])
        cnt = jnp.sum(in_bin)
        prop = cnt / conf.shape[0]
        safe = jnp.maximum(cnt, 1)
        a = jnp.sum(jnp.where(in_bin, acc, 0.0)) / safe
        cf = jnp.sum(jnp.where(in_bin, conf, 0.0)) / safe
        ece = ece + jnp.where(cnt > 0, jnp.abs(cf - a) * prop, 0.0)
    return ece.reshape(1)


if __name__ == "__main__":
    key = jax.random.PRNGKey(0)
    k_logits, k_labels = jax.random.split(key)

    # Small (batch, num_classes) shapes consistent with the module; N is not a
    # multiple of the tile so the ragged-tile mask and the 2-tile grid run.
    N, C = 200, 10
    logits = jax.random.normal(k_logits, (N, C), dtype=jnp.float32) * 3.0
    labels = jax.random.randint(k_labels, (N,), 0, C, dtype=jnp.int32)

    ece = ece_loss(logits, labels, block_n=128)
    jax.block_until_ready(ece)
    assert ece.shape == (1,)

    ref = _ece_reference(logits, labels)
    assert jnp.allclose(ece, ref, atol=1e-5), (ece, ref)
    print("KERNEL_OK")
</pallas_src>

<mosaic_0001>
module attributes {stable_mosaic.version = 11 : i64} {
  func.func @_ece_partial_kernel(%arg0: i32, %arg1: memref<10x128xf32, #tpu.memory_space<vmem>>, %arg2: memref<1x128xi32, #tpu.memory_space<vmem>>, %arg3: memref<1x15x1xf32, #tpu.memory_space<vmem>>, %arg4: memref<1x15x1xf32, #tpu.memory_space<vmem>>, %arg5: memref<1x15x1xf32, #tpu.memory_space<vmem>>) attributes {dimension_semantics = [#tpu.dimension_semantics<parallel>], iteration_bounds = array<i64: 2>, scalar_prefetch = 0 : i64, scratch_operands = 0 : i64, tpu.core_type = #tpu.core_type<tc>, window_params = [{transform_indices = @transform_0, window_bounds = array<i64: 10, 128>}, {transform_indices = @transform_1, window_bounds = array<i64: 1, 128>}, {transform_indices = @transform_2, window_bounds = array<i64: 1, 15, 1>}, {transform_indices = @transform_3, window_bounds = array<i64: 1, 15, 1>}, {transform_indices = @transform_4, window_bounds = array<i64: 1, 15, 1>}]} {
    %c0 = arith.constant 0 : index
    %c0_0 = arith.constant 0 : index
    %0 = vector.load %arg1[%c0, %c0_0] : memref<10x128xf32, #tpu.memory_space<vmem>>, vector<10x128xf32>
    %cst = arith.constant dense<0xFF800000> : vector<128xf32>
    %1 = vector.multi_reduction <maximumf>, %0, %cst [0] : vector<10x128xf32> to vector<128xf32>
    %2 = vector.shape_cast %1 : vector<128xf32> to vector<1x128xf32>
    %3 = vector.broadcast %2 : vector<1x128xf32> to vector<10x128xf32>
    %4 = arith.subf %0, %3 : vector<10x128xf32>
    %5 = math.exp %4 : vector<10x128xf32>
    %cst_1 = arith.constant dense<0.000000e+00> : vector<128xf32>
    %6 = vector.multi_reduction <add>, %5, %cst_1 [0] : vector<10x128xf32> to vector<128xf32>
    %7 = vector.shape_cast %6 : vector<128xf32> to vector<1x128xf32>
    %8 = tpu.reciprocal %7 : vector<1x128xf32> -> vector<1x128xf32>
    %9 = tpu.iota {dimensions = array<i32: 0>} : vector<10x128xi32>
    %10 = vector.broadcast %2 : vector<1x128xf32> to vector<10x128xf32>
    %11 = arith.cmpf oge, %0, %10 : vector<10x128xf32>
    %c10_i32 = arith.constant 10 : i32
    %12 = vector.broadcast %c10_i32 : i32 to vector<10x128xi32>
    %13 = arith.select %11, %9, %12 : vector<10x128xi1>, vector<10x128xi32>
    %cst_2 = arith.constant dense<2147483647> : vector<128xi32>
    %14 = vector.multi_reduction <minsi>, %13, %cst_2 [0] : vector<10x128xi32> to vector<128xi32>
    %15 = vector.shape_cast %14 : vector<128xi32> to vector<1x128xi32>
    %c0_3 = arith.constant 0 : index
    %c0_4 = arith.constant 0 : index
    %16 = vector.load %arg2[%c0_3, %c0_4] : memref<1x128xi32, #tpu.memory_space<vmem>>, vector<1x128xi32>
    %17 = arith.cmpi eq, %15, %16 : vector<1x128xi32>
    %18 = arith.extui %17 : vector<1x128xi1> to vector<1x128xi32>
    %19 = arith.sitofp %18 : vector<1x128xi32> to vector<1x128xf32>
    %20 = tpu.iota {dimensions = array<i32: 1>} : vector<1x128xi32>
    %c128_i32 = arith.constant 128 : i32
    %21 = arith.muli %arg0, %c128_i32 : i32
    %22 = vector.broadcast %21 : i32 to vector<1x128xi32>
    %23 = arith.addi %20, %22 : vector<1x128xi32>
    %c200_i32 = arith.constant 200 : i32
    %24 = vector.broadcast %c200_i32 : i32 to vector<1x128xi32>
    %25 = arith.cmpi slt, %23, %24 : vector<1x128xi32>
    %cst_5 = arith.constant 0.000000e+00 : f32
    %26 = vector.broadcast %cst_5 : f32 to vector<1x128xf32>
    %27 = arith.select %25, %8, %26 : vector<1x128xi1>, vector<1x128xf32>
    %28 = tpu.iota {dimensions = array<i32: 0>} : vector<15x1xi32>
    %29 = arith.sitofp %28 : vector<15x1xi32> to vector<15x1xf32>
    %cst_6 = arith.constant 0.0666666701 : f32
    %30 = vector.broadcast %cst_6 : f32 to vector<15x1xf32>
    %31 = arith.mulf %29, %30 : vector<15x1xf32>
    %cst_7 = arith.constant 1.000000e+00 : f32
    %32 = vector.broadcast %cst_7 : f32 to vector<15x1xf32>
    %33 = arith.addf %29, %32 : vector<15x1xf32>
    %cst_8 = arith.constant 0.0666666701 : f32
    %34 = vector.broadcast %cst_8 : f32 to vector<15x1xf32>
    %35 = arith.mulf %33, %34 : vector<15x1xf32>
    %36 = vector.broadcast %27 : vector<1x128xf32> to vector<15x128xf32>
    %37 = vector.broadcast %31 : vector<15x1xf32> to vector<15x128xf32>
    %38 = arith.cmpf ogt, %36, %37 : vector<15x128xf32>
    %39 = vector.broadcast %27 : vector<1x128xf32> to vector<15x128xf32>
    %40 = vector.broadcast %35 : vector<15x1xf32> to vector<15x128xf32>
    %41 = arith.cmpf ole, %39, %40 : vector<15x128xf32>
    %42 = arith.andi %38, %41 : vector<15x128xi1>
    %43 = arith.extui %42 : vector<15x128xi1> to vector<15x128xi32>
    %44 = arith.sitofp %43 : vector<15x128xi32> to vector<15x128xf32>
    %cst_9 = arith.constant dense<0.000000e+00> : vector<15xf32>
    %45 = vector.multi_reduction <add>, %44, %cst_9 [1] : vector<15x128xf32> to vector<15xf32>
    %46 = vector.shape_cast %45 : vector<15xf32> to vector<15x1xf32>
    %47 = vector.shape_cast %46 : vector<15x1xf32> to vector<1x15x1xf32>
    %c0_10 = arith.constant 0 : index
    %c0_11 = arith.constant 0 : index
    %c0_12 = arith.constant 0 : index
    %48 = vector.load %arg3[%c0_10, %c0_11, %c0_12] : memref<1x15x1xf32, #tpu.memory_space<vmem>>, vector<1x15x1xf32>
    tpu.vector_store %arg3[%c0_10, %c0_11, %c0_12], %47 {strides = array<i32>} : memref<1x15x1xf32, #tpu.memory_space<vmem>>, vector<1x15x1xf32>,
    %49 = vector.broadcast %19 : vector<1x128xf32> to vector<15x128xf32>
    %50 = arith.mulf %44, %49 : vector<15x128xf32>
    %cst_13 = arith.constant dense<0.000000e+00> : vector<15xf32>
    %51 = vector.multi_reduction <add>, %50, %cst_13 [1] : vector<15x128xf32> to vector<15xf32>
    %52 = vector.shape_cast %51 : vector<15xf32> to vector<15x1xf32>
    %53 = vector.shape_cast %52 : vector<15x1xf32> to vector<1x15x1xf32>
    %c0_14 = arith.constant 0 : index
    %c0_15 = arith.constant 0 : index
    %c0_16 = arith.constant 0 : index
    %54 = vector.load %arg4[%c0_14, %c0_15, %c0_16] : memref<1x15x1xf32, #tpu.memory_space<vmem>>, vector<1x15x1xf32>
    tpu.vector_store %arg4[%c0_14, %c0_15, %c0_16], %53 {strides = array<i32>} : memref<1x15x1xf32, #tpu.memory_space<vmem>>, vector<1x15x1xf32>,
    %55 = vector.broadcast %27 : vector<1x128xf32> to vector<15x128xf32>
    %56 = arith.mulf %44, %55 : vector<15x128xf32>
    %cst_17 = arith.constant dense<0.000000e+00> : vector<15xf32>
    %57 = vector.multi_reduction <add>, %56, %cst_17 [1] : vector<15x128xf32> to vector<15xf32>
    %58 = vector.shape_cast %57 : vector<15xf32> to vector<15x1xf32>
    %59 = vector.shape_cast %58 : vector<15x1xf32> to vector<1x15x1xf32>
    %c0_18 = arith.constant 0 : index
    %c0_19 = arith.constant 0 : index
    %c0_20 = arith.constant 0 : index
    %60 = vector.load %arg5[%c0_18, %c0_19, %c0_20] : memref<1x15x1xf32, #tpu.memory_space<vmem>>, vector<1x15x1xf32>
    tpu.vector_store %arg5[%c0_18, %c0_19, %c0_20], %59 {strides = array<i32>} : memref<1x15x1xf32, #tpu.memory_space<vmem>>, vector<1x15x1xf32>,
    return
  }
  func.func @transform_0(%arg0: i32) -> (i32, i32) {
    %c0_i32 = arith.constant 0 : i32
    %c0_i32_0 = arith.constant 0 : i32
    return %c0_i32, %arg0 : i32, i32
  }
  func.func @transform_1(%arg0: i32) -> (i32, i32) {
    %c0_i32 = arith.constant 0 : i32
    %c0_i32_0 = arith.constant 0 : i32
    return %c0_i32, %arg0 : i32, i32
  }
  func.func @transform_2(%arg0: i32) -> (i32, i32, i32) {
    %c0_i32 = arith.constant 0 : i32
    %c0_i32_0 = arith.constant 0 : i32
    %c0_i32_1 = arith.constant 0 : i32
    return %arg0, %c0_i32, %c0_i32_0 : i32, i32, i32
  }
  func.func @transform_3(%arg0: i32) -> (i32, i32, i32) {
    %c0_i32 = arith.constant 0 : i32
    %c0_i32_0 = arith.constant 0 : i32
    %c0_i32_1 = arith.constant 0 : i32
    return %arg0, %c0_i32, %c0_i32_0 : i32, i32, i32
  }
  func.func @transform_4(%arg0: i32) -> (i32, i32, i32) {
    %c0_i32 = arith.constant 0 : i32
    %c0_i32_0 = arith.constant 0 : i32
    %c0_i32_1 = arith.constant 0 : i32
    return %arg0, %c0_i32, %c0_i32_0 : i32, i32, i32
  }
}

</mosaic_0001>

<llo_original>
// kernel: ece_loss.1
$region0: #{ece_loss.1}
  #allocation0 [shape = 'u32[]', space=smem, size = 0x4, offset = 0x4, fixed_abs, tag = 'smem constant byte address 0x4 - core index']
  #allocation1 [shape = 'u32[144,128]{1,0:T(1,128)}', space=vmem, size = 0x12000, scoped, tag = 'internal scratch']
  %s0 = inlined_call_operand.hbm [shape: f32[10,200], index: 0, kind: input, shape index: {}]
  %s1 = inlined_call_operand.vmem [shape: s32[1,200], index: 1, kind: input, shape index: {}]
  %s2 = inlined_call_operand.vmem [shape: f32[2,15,1], index: 2, kind: output, shape index: {0}]
  %s3 = inlined_call_operand.vmem [shape: f32[2,15,1], index: 3, kind: output, shape index: {1}]
  %s4 = inlined_call_operand.vmem [shape: f32[2,15,1], index: 4, kind: output, shape index: {2}]
  %5 = xla_tuple %s2, %s3, %s4
  %s6 = sld [smem:[#allocation0]]
  $region61: #{ece_loss.1} parent=0
    _
  %s8 = ssub.s32 1, %s6
  %s9 = scalar_select 0, %s8, %s6
  $region1: #{ece_loss.1} parent=0
    #allocation2 [shape = 'u8[16384]{0}', space=vmem, size = 0x4000, scoped, tag = 'input window, operand 0']
    #allocation3 [shape = 's32[2]{0}', space=sflag, size = 0x8, scoped, tag = 'scoped memory for ece_loss.1']
    %10 = vsyncpa [#allocation3], 0
    %s11 = scalar_lea.sflag [#allocation3], 1
    %12 = vsyncpa %s11, 0
    loop: start=0, step=1, limit=4
    $region2: #{ece_loss.1} parent=1 // loop_pre_header
      _
    $region3: #{ece_loss.1} parent=1 // loop_header
      %s14 = sphi 0, %s18
      %p15 = scmp.ge.s32.totalorder %s14, 4
      %s24 = sphi 0, %s26
      %s27 = sphi 0, %s24
      %s28 = sphi 0, %s27
      %s44 = sphi 0, %s28
      %s50 = sphi 0, %s52
      %s53 = sphi 0, %s50
      %s54 = sphi 0, %s53
      %s70 = sphi 0, %s54
      %s76 = sphi 0, %s78
      %s79 = sphi 0, %s76
      %s80 = sphi 0, %s79
      %s96 = sphi 0, %s80
      %s102 = sphi 0, %s104
      %s105 = sphi 0, %s102
      %s106 = sphi 0, %s105
      %s122 = sphi 0, %s106
      %s128 = sphi 0, %s130
      %s131 = sphi 0, %s128
      %s132 = sphi 0, %s131
      %s148 = sphi 0, %s132
    $region4: #{ece_loss.1} parent=1 // loop_header_branch
      %17 = sbr.rel (%p15) target = $region8
    $region5: #{ece_loss.1} parent=1 // loop_body
      %s19 = ssub.s32 %s14, 1
      %s20 = ssub.s32 %s14, 2
      %s21 = sadd.s32 %s14, 1
      %s22 = ssub.s32 %s14, %s21
      %p23 = scmp.eq.s32.totalorder %s22, 0
      %s25 = sadd.s32 %s24, 1
      %s26 = scalar_select %p23, %s24, %s25
      %p29 = pneg %p23
      %p30 = scmp.eq.s32.totalorder %s14, 1
      %p31 = por %p29, %p30
      %p32 = scmp.ne.s32.totalorder %s24, %s27
      %p33 = scmp.eq.s32.totalorder %s14, 0
      %p34 = por %p32, %p33
      %p35 = scmp.ne.s32.totalorder %s24, %s27
      %p36 = scmp.eq.s32.totalorder %s19, 1
      %p37 = por %p35, %p36
      %p38 = scmp.ne.s32.totalorder %s27, %s28
      %p39 = scmp.eq.s32.totalorder %s19, 0
      %p40 = por %p38, %p39
      %p41 = scmp.ne.s32.totalorder %s27, %s28
      %p42 = scmp.eq.s32.totalorder %s20, 1
      %p43 = por %p41, %p42
      %p45 = scmp.ne.s32.totalorder %s28, %s44
      %p46 = scmp.eq.s32.totalorder %s20, 0
      %p47 = por %p45, %p46
      %s48 = ssub.s32 %s14, %s21
      %p49 = scmp.eq.s32.totalorder %s48, 0
      %s51 = sadd.s32 %s50, 1
      %s52 = scalar_select %p49, %s50, %s51
      %p55 = pneg %p49
      %p56 = scmp.eq.s32.totalorder %s14, 1
      %p57 = por %p55, %p56
      %p58 = scmp.ne.s32.totalorder %s50, %s53
      %p59 = scmp.eq.s32.totalorder %s14, 0
      %p60 = por %p58, %p59
      %p61 = scmp.ne.s32.totalorder %s50, %s53
      %p62 = scmp.eq.s32.totalorder %s19, 1
      %p63 = por %p61, %p62
      %p64 = scmp.ne.s32.totalorder %s53, %s54
      %p65 = scmp.eq.s32.totalorder %s19, 0
      %p66 = por %p64, %p65
      %p67 = scmp.ne.s32.totalorder %s53, %s54
      %p68 = scmp.eq.s32.totalorder %s20, 1
      %p69 = por %p67, %p68
      %p71 = scmp.ne.s32.totalorder %s54, %s70
      %p72 = scmp.eq.s32.totalorder %s20, 0
      %p73 = por %p71, %p72
      %s74 = ssub.s32 %s14, %s21
      %p75 = scmp.eq.s32.totalorder %s74, 0
      %s77 = sadd.s32 %s76, 1
      %s78 = scalar_select %p75, %s76, %s77
      %p81 = pneg %p75
      %p82 = scmp.eq.s32.totalorder %s14, 1
      %p83 = por %p81, %p82
      %p84 = scmp.ne.s32.totalorder %s76, %s79
      %p85 = scmp.eq.s32.totalorder %s14, 0
      %p86 = por %p84, %p85
      %p87 = scmp.ne.s32.totalorder %s76, %s79
      %p88 = scmp.eq.s32.totalorder %s19, 1
      %p89 = por %p87, %p88
      %p90 = scmp.ne.s32.totalorder %s79, %s80
      %p91 = scmp.eq.s32.totalorder %s19, 0
      %p92 = por %p90, %p91
      %p93 = scmp.ne.s32.totalorder %s79, %s80
      %p94 = scmp.eq.s32.totalorder %s20, 1
      %p95 = por %p93, %p94
      %p97 = scmp.ne.s32.totalorder %s80, %s96
      %p98 = scmp.eq.s32.totalorder %s20, 0
      %p99 = por %p97, %p98
      %s100 = ssub.s32 %s14, %s21
      %p101 = scmp.eq.s32.totalorder %s100, 0
      %s103 = sadd.s32 %s102, 1
      %s104 = scalar_select %p101, %s102, %s103
      %p107 = pneg %p101
      %p108 = scmp.eq.s32.totalorder %s14, 1
      %p109 = por %p107, %p108
      %p110 = scmp.ne.s32.totalorder %s102, %s105
      %p111 = scmp.eq.s32.totalorder %s14, 0
      %p112 = por %p110, %p111
      %p113 = scmp.ne.s32.totalorder %s102, %s105
      %p114 = scmp.eq.s32.totalorder %s19, 1
      %p115 = por %p113, %p114
      %p116 = scmp.ne.s32.totalorder %s105, %s106
      %p117 = scmp.eq.s32.totalorder %s19, 0
      %p118 = por %p116, %p117
      %p119 = scmp.ne.s32.totalorder %s105, %s106
      %p120 = scmp.eq.s32.totalorder %s20, 1
      %p121 = por %p119, %p120
      %p123 = scmp.ne.s32.totalorder %s106, %s122
      %p124 = scmp.eq.s32.totalorder %s20, 0
      %p125 = por %p123, %p124
      %s126 = ssub.s32 %s14, %s21
      %p127 = scmp.eq.s32.totalorder %s126, 0
      %s129 = sadd.s32 %s128, 1
      %s130 = scalar_select %p127, %s128, %s129
      %p133 = pneg %p127
      %p134 = scmp.eq.s32.totalorder %s14, 1
      %p135 = por %p133, %p134
      %p136 = scmp.ne.s32.totalorder %s128, %s131
      %p137 = scmp.eq.s32.totalorder %s14, 0
      %p138 = por %p136, %p137
      %p139 = scmp.ne.s32.totalorder %s128, %s131
      %p140 = scmp.eq.s32.totalorder %s19, 1
      %p141 = por %p139, %p140
      %p142 = scmp.ne.s32.totalorder %s131, %s132
      %p143 = scmp.eq.s32.totalorder %s19, 0
      %p144 = por %p142, %p143
      %p145 = scmp.ne.s32.totalorder %s131, %s132
      %p146 = scmp.eq.s32.totalorder %s20, 1
      %p147 = por %p145, %p146
      %p149 = scmp.ne.s32.totalorder %s132, %s148
      %p150 = scmp.eq.s32.totalorder %s20, 0
      %p151 = por %p149, %p150
      %p152 = scmp.le.s32.totalorder 1, %s14
      %p153 = scmp.lt.s32.totalorder %s14, 3
      %p154 = pnand %p152, %p153
      %p155 = pneg %p154
      // Predicated region
      $region9: #{ece_loss.1} parent=5 // pred_check
        _
      $region10: #{ece_loss.1} parent=5 // pred_check_branch
        %157 = sbr.rel (%p154) target = $region12
      $region11: #{ece_loss.1} parent=5 // pred_region
        %s158 = ssub.s32 %s14, 1
      $region12: #{ece_loss.1} parent=5 // pred_fallthru
        _
      %p159 = scmp.lt.s32.totalorder %s14, 2
      // Predicated region
      $region13: #{ece_loss.1} parent=5 // pred_check
        %p160 = pneg %p159
      $region14: #{ece_loss.1} parent=5 // pred_check_branch
        %162 = sbr.rel (%p160) target = $region16
      $region15: #{ece_loss.1} parent=5 // pred_region
        // Predicated region
        $region17: #{ece_loss.1} parent=15 // pred_check
          %p163 = pneg %p34
        $region18: #{ece_loss.1} parent=15 // pred_check_branch
          %165 = sbr.rel (%p163) target = $region20
        $region19: #{ece_loss.1} parent=15 // pred_region
          %s166 = sand.u32 %s24, 1
          %s167 = scalar_lea.sflag [#allocation3], %s166
          %s168 = sand.u32 %s24, 1
          %s169 = smul.addr %s168, 16
          %s170 = scalar_lea.vmem [#allocation2], %s169
          %s172 = ssub.s32 256, 256
          %173 = vsyncadd %s167, %s172
          %s174 = smul.addr %s14, 128
          %s175 = scalar_lea.hbm %s0, %s174
          %s176 = sshll.u32 %s170, 4
          %s177 = int_to_ptr.vmem [resolvable:$true] %s176
          %182 = dma.hbm_to_vmem [thread:$0]  %s175, 256, %s177, %s167, 256, 128, 8
        $region20: #{ece_loss.1} parent=15 // pred_fallthru
          _
        // Predicated region
        $region21: #{ece_loss.1} parent=15 // pred_check
          %p183 = pneg %p60
        $region22: #{ece_loss.1} parent=15 // pred_check_branch
          %185 = sbr.rel (%p183) target = $region24
        $region23: #{ece_loss.1} parent=15 // pred_region
          %p186 = scmp.lt.s32.totalorder %s14, 1
          %s187 = scalar_select %p186, %s14, 1
          %s188 = scalar_lea.vmem %s1, %s187
        $region24: #{ece_loss.1} parent=15 // pred_fallthru
          _
      $region16: #{ece_loss.1} parent=5 // pred_fallthru
        _
      %p189 = scmp.le.s32.totalorder 1, %s14
      %p190 = scmp.lt.s32.totalorder %s14, 3
      %p191 = pnand %p189, %p190
      %p192 = pneg %p191
      // Predicated region
      $region25: #{ece_loss.1} parent=5 // pred_check
        _
      $region26: #{ece_loss.1} parent=5 // pred_check_branch
        %194 = sbr.rel (%p191) target = $region28
      $region27: #{ece_loss.1} parent=5 // pred_region
        %s195 = ssub.s32 %s14, 1
        %s196 = sand.u32 %s27, 1
        %s197 = scalar_lea.sflag [#allocation3], %s196
        %s198 = sand.u32 %s27, 1
        %s199 = smul.addr %s198, 16
        %s200 = scalar_lea.vmem [#allocation2], %s199
        // Predicated region
        $region29: #{ece_loss.1} parent=27 // pred_check
          %p201 = pneg %p40
        $region30: #{ece_loss.1} parent=27 // pred_check_branch
          %203 = sbr.rel (%p201) target = $region32
        $region31: #{ece_loss.1} parent=27 // pred_region
          %204 = dma.done %s197, 256
        $region32: #{ece_loss.1} parent=27 // pred_fallthru
          _
        %s205 = sand.u32 %s27, 1
        %s206 = scalar_lea.sflag [#allocation3], %s205
        %s207 = sand.u32 %s27, 1
        %s208 = smul.addr %s207, 16
        %s209 = scalar_lea.vmem [#allocation2], %s208
        %p210 = pneg %p40
        %p211 = pneg %p37
        %p212 = scmp.lt.s32.totalorder %s19, 1
        %s213 = scalar_select %p212, %s19, 1
        %s214 = scalar_lea.vmem %s1, %s213
        %p215 = pneg %p66
        %p216 = pneg %p63
        %p217 = pneg %p92
        %p218 = pneg %p89
        %p219 = scmp.lt.s32.totalorder %s19, 1
        %s220 = scalar_select %p219, %s19, 1
        %s221 = smul.addr %s220, 2
        %s222 = smul.addr %s221, 8
        %s223 = scalar_lea.vmem %s2, %s222
        %p224 = pneg %p118
        %p225 = pneg %p115
        %p226 = scmp.lt.s32.totalorder %s19, 1
        %s227 = scalar_select %p226, %s19, 1
        %s228 = smul.addr %s227, 2
        %s229 = smul.addr %s228, 8
        %s230 = scalar_lea.vmem %s3, %s229
        %p231 = pneg %p144
        %p232 = pneg %p141
        %p233 = scmp.lt.s32.totalorder %s19, 1
        %s234 = scalar_select %p233, %s19, 1
        %s235 = smul.addr %s234, 2
        %s236 = smul.addr %s235, 8
        %s237 = scalar_lea.vmem %s4, %s236
        %p238 = scmp.lt.s32.totalorder %s19, 1
        %s239 = scalar_select %p238, %s19, 1
        %s240 = scalar_lea.vmem %s1, %s239
        %p241 = scmp.lt.s32.totalorder %s19, 1
        %s242 = scalar_select %p241, %s19, 1
        %s243 = smul.addr %s242, 2
        %s244 = smul.addr %s243, 8
        %s245 = scalar_lea.vmem %s2, %s244
        %p246 = scmp.lt.s32.totalorder %s19, 1
        %s247 = scalar_select %p246, %s19, 1
        %s248 = smul.addr %s247, 2
        %s249 = smul.addr %s248, 8
        %s250 = scalar_lea.vmem %s3, %s249
        %p251 = scmp.lt.s32.totalorder %s19, 1
        %s252 = scalar_select %p251, %s19, 1
        %s253 = smul.addr %s252, 2
        %s254 = smul.addr %s253, 8
        %s255 = scalar_lea.vmem %s4, %s254
        %v256 = vld [vmem:[%s200] sm:$0xff]
        %v257 = vld [vmem:[%s200 + $0x8] sm:$0x3]
        %vm258 = vcmask 1041408
        %v259 = vsel %vm258, %v257, -inf
        %v260 = vmax.f32 %v256, %v259
        %v261 = vrot.slane %v260, 4
        %v262 = vmax.f32 %v260, %v261
        %v263 = vrot.slane %v262, 2
        %v264 = vmax.f32 %v262, %v263
        %v265 = vrot.slane %v264, 1
        %v266 = vmax.f32 %v264, %v265
        %v267 = vsub.f32 %v256, %v266
        %v268 = vsub.f32 %v257, %v266
        %v269 = vmul.f32 %v267, 1.442695
        %v270 = vpow.pop %v269
        %v271 = vmul.f32 %v268, 1.442695
        %v272 = vpow.pop %v271
        %v273 = vsel %vm258, %v272, 0.0
        %v274 = vadd.f32 %v270, %v273
        %v275 = vrot.slane %v274, 4
        %v276 = vadd.f32 %v274, %v275
        %v277 = vrot.slane %v276, 2
        %v278 = vadd.f32 %v276, %v277
        %v279 = vrot.slane %v278, 1
        %v280 = vadd.f32 %v278, %v279
        %v281 = vrcp.pop %v280
        %v282 = vlaneseq
        %v283 = vshrl.u32 %v282, 7
        %v284 = vadd.s32 %v283, 8
        %vm285 = vcmp.ge.f32.partialorder %v256, %v266
        %vm286 = vcmp.ge.f32.partialorder %v257, %v266
        %v287 = vsel %vm285, %v283, 10
        %v288 = vsel %vm286, %v284, 10
        %v289 = vsel %vm258, %v288, 2147483647
        %vm290 = vcmp.lt.s32.totalorder %v287, %v289
        %v291 = vsel %vm290, %v287, %v289
        %v292 = vrot.slane %v291, 4
        %vm293 = vcmp.lt.s32.totalorder %v291, %v292
        %v294 = vsel %vm293, %v291, %v292
        %v295 = vrot.slane %v294, 2
        %vm296 = vcmp.lt.s32.totalorder %v294, %v295
        %v297 = vsel %vm296, %v294, %v295
        %v298 = vrot.slane %v297, 1
        %vm299 = vcmp.lt.s32.totalorder %v297, %v298
        %v300 = vsel %vm299, %v297, %v298
        %v301 = vld [vmem:[%s240] sm:$0x1]
        %vm302 = vcmp.eq.s32.totalorder %v300, %v301
        %v303 = vsel %vm302, 1, 0
        %v304 = vcvt.s32.f32 %v303
        %v305 = vlaneseq
        %v306 = vand.u32 %v305, 127
        %s307 = smul.u32 %s19, 128
        %v308 = vstv %s307
        %v309 = vadd.s32 %v306, %v308
        %vm310 = vcmp.lt.s32.totalorder %v309, 200
        %v311 = vsel %vm310, %v281, 0.0
        %v312 = vcvt.s32.f32 %v283
        %v313 = vcvt.s32.f32 %v284
        %v314 = vmul.f32 %v312, 0.06666667
        %v315 = vmul.f32 %v313, 0.06666667
        %v316 = vadd.f32 %v312, 1.0
        %v317 = vadd.f32 %v313, 1.0
        %v318 = vmul.f32 %v316, 0.06666667
        %v319 = vmul.f32 %v317, 0.06666667
        %vm320 = vcmp.gt.f32.partialorder %v311, %v314
        %vm321 = vcmp.gt.f32.partialorder %v311, %v315
        %vm322 = vcmp.le.f32.partialorder %v311, %v318
        %vm323 = vcmp.le.f32.partialorder %v311, %v319
        %vm324 = vmand %vm320, %vm322
        %vm325 = vmand %vm321, %vm323
        %v326 = vsel %vm324, 1, 0
        %v327 = vsel %vm325, 1, 0
        %v328 = vcvt.s32.f32 %v326
        %v329 = vcvt.s32.f32 %v327
        %330 = vadd.xlane.f32.xlu0 %v328
        %v331 = vpop.xlane.xlu0 %330
        %vm332 = vcmask 1046528
        %v333 = vsel %vm332, %v329, 0.0
        %334 = vadd.xlane.f32.xlu0 %v333
        %v335 = vpop.xlane.xlu0 %334
        %vm336 = vcmask 7168
        %337 = vst.msk [vmem:[%s245] sm:$0xff] %vm336, %v331
        %vm338 = vcmask 6144
        %339 = vst.msk [vmem:[%s245 + $0x8] sm:$0x7f] %vm338, %v335
        %v340 = vlaneseq
        %v341 = vshrl.u32 %v340, 7
        %v342 = vsub.s32 0, %v341
        %v343 = vrot.slane %v304, %v342
        %v344 = vmul.f32 %v328, %v343
        %v345 = vmul.f32 %v329, %v343
        %346 = vadd.xlane.f32.xlu0 %v344
        %v347 = vpop.xlane.xlu0 %346
        %v348 = vsel %vm332, %v345, 0.0
        %349 = vadd.xlane.f32.xlu0 %v348
        %v350 = vpop.xlane.xlu0 %349
        %351 = vst.msk [vmem:[%s250] sm:$0xff] %vm336, %v347
        %352 = vst.msk [vmem:[%s250 + $0x8] sm:$0x7f] %vm338, %v350
        %v353 = vmul.f32 %v328, %v311
        %v354 = vmul.f32 %v329, %v311
        %355 = vadd.xlane.f32.xlu0 %v353
        %v356 = vpop.xlane.xlu0 %355
        %v357 = vsel %vm332, %v354, 0.0
        %358 = vadd.xlane.f32.xlu0 %v357
        %v359 = vpop.xlane.xlu0 %358
        %360 = vst.msk [vmem:[%s255] sm:$0xff] %vm336, %v356
        %361 = vst.msk [vmem:[%s255 + $0x8] sm:$0x7f] %vm338, %v359
        %p362 = scmp.lt.s32.totalorder %s19, 1
        %s363 = scalar_select %p362, %s19, 1
        %s364 = smul.addr %s363, 2
        %s365 = smul.addr %s364, 8
        %s366 = scalar_lea.vmem %s2, %s365
        %p367 = scmp.lt.s32.totalorder %s19, 1
        %s368 = scalar_select %p367, %s19, 1
        %s369 = smul.addr %s368, 2
        %s370 = smul.addr %s369, 8
        %s371 = scalar_lea.vmem %s3, %s370
        %p372 = scmp.lt.s32.totalorder %s19, 1
        %s373 = scalar_select %p372, %s19, 1
        %s374 = smul.addr %s373, 2
        %s375 = smul.addr %s374, 8
        %s376 = scalar_lea.vmem %s4, %s375
        // Predicated region
        $region33: #{ece_loss.1} parent=27 // pred_check
          %p377 = pneg %p89
        $region34: #{ece_loss.1} parent=27 // pred_check_branch
          %379 = sbr.rel (%p377) target = $region36
        $region35: #{ece_loss.1} parent=27 // pred_region
          _
        $region36: #{ece_loss.1} parent=27 // pred_fallthru
          _
        // Predicated region
        $region37: #{ece_loss.1} parent=27 // pred_check
          %p380 = pneg %p115
        $region38: #{ece_loss.1} parent=27 // pred_check_branch
          %382 = sbr.rel (%p380) target = $region40
        $region39: #{ece_loss.1} parent=27 // pred_region
          _
        $region40: #{ece_loss.1} parent=27 // pred_fallthru
          _
        // Predicated region
        $region41: #{ece_loss.1} parent=27 // pred_check
          %p383 = pneg %p141
        $region42: #{ece_loss.1} parent=27 // pred_check_branch
          %385 = sbr.rel (%p383) target = $region44
        $region43: #{ece_loss.1} parent=27 // pred_region
          _
        $region44: #{ece_loss.1} parent=27 // pred_fallthru
          _
      $region28: #{ece_loss.1} parent=5 // pred_fallthru
        _
      %p386 = scmp.le.s32.totalorder 2, %s14
      // Predicated region
      $region45: #{ece_loss.1} parent=5 // pred_check
        %p387 = pneg %p386
      $region46: #{ece_loss.1} parent=5 // pred_check_branch
        %389 = sbr.rel (%p387) target = $region48
      $region47: #{ece_loss.1} parent=5 // pred_region
        %s390 = ssub.s32 %s14, 2
        // Predicated region
        $region49: #{ece_loss.1} parent=47 // pred_check
          %p391 = pneg %p95
        $region50: #{ece_loss.1} parent=47 // pred_check_branch
          %393 = sbr.rel (%p391) target = $region52
        $region51: #{ece_loss.1} parent=47 // pred_region
          %p394 = scmp.lt.s32.totalorder %s20, 1
          %s395 = scalar_select %p394, %s20, 1
          %s396 = smul.addr %s395, 2
          %s397 = smul.addr %s396, 8
          %s398 = scalar_lea.vmem %s2, %s397
        $region52: #{ece_loss.1} parent=47 // pred_fallthru
          _
        // Predicated region
        $region53: #{ece_loss.1} parent=47 // pred_check
          %p399 = pneg %p121
        $region54: #{ece_loss.1} parent=47 // pred_check_branch
          %401 = sbr.rel (%p399) target = $region56
        $region55: #{ece_loss.1} parent=47 // pred_region
          %p402 = scmp.lt.s32.totalorder %s20, 1
          %s403 = scalar_select %p402, %s20, 1
          %s404 = smul.addr %s403, 2
          %s405 = smul.addr %s404, 8
          %s406 = scalar_lea.vmem %s3, %s405
        $region56: #{ece_loss.1} parent=47 // pred_fallthru
          _
        // Predicated region
        $region57: #{ece_loss.1} parent=47 // pred_check
          %p407 = pneg %p147
        $region58: #{ece_loss.1} parent=47 // pred_check_branch
          %409 = sbr.rel (%p407) target = $region60
        $region59: #{ece_loss.1} parent=47 // pred_region
          %p410 = scmp.lt.s32.totalorder %s20, 1
          %s411 = scalar_select %p410, %s20, 1
          %s412 = smul.addr %s411, 2
          %s413 = smul.addr %s412, 8
          %s414 = scalar_lea.vmem %s4, %s413
        $region60: #{ece_loss.1} parent=47 // pred_fallthru
          _
      $region48: #{ece_loss.1} parent=5 // pred_fallthru
        _
    $region6: #{ece_loss.1} parent=1 // loop_footer
      %s18 = sadd.s32 1, %s14
    $region7: #{ece_loss.1} parent=1 // loop_footer_branch
      %13 = sbr.rel target = $region3
    $region8: #{ece_loss.1} parent=1 // loop_exit
      _
    %415 = vsyncpa [#allocation3], 1
    %s416 = scalar_lea.sflag [#allocation3], 1
    %417 = vsyncpa %s416, 1

</llo_original>
